<compile_context>
chip_gen: v7x
topology: tpu7x:2x2x1
jax: 0.10.0
libtpu: 0.0.40
codegen_flags: <defaults>
</compile_context>

<pallas_src>
import functools
import math

import jax
import jax.numpy as jnp
from jax.experimental import pallas as pl
from jax.experimental.pallas import tpu as pltpu


# --------------------------------------------------------------------------------------
# Kernels
# --------------------------------------------------------------------------------------
def _pos_enc_kernel(x_ref, pe_ref, o_ref):
    """Eval / p==0 path: out = x + pe (pe broadcast over the batch axis)."""
    pe = pe_ref[...].astype(x_ref.dtype)          # (T, 1, D), no-op cast for f32
    o_ref[...] = (x_ref[...] + pe).astype(o_ref.dtype)


def _pos_enc_dropout_kernel(x_ref, pe_ref, bits_ref, o_ref, *, keep_threshold, inv_keep):
    """Training path: out = dropout(x + pe) with inverted-dropout scaling.

    keep iff bits >= keep_threshold, where keep_threshold = round(p * 2^32), so
    P(drop) = p to within 2^-32.  One compare + one select + one multiply per element.
    """
    pe = pe_ref[...].astype(x_ref.dtype)          # (T, 1, D)
    y = x_ref[...] + pe                           # (T, B, D), broadcast over batch
    keep = bits_ref[...] >= jnp.uint32(keep_threshold)
    scale = jnp.asarray(inv_keep, dtype=y.dtype)
    zero = jnp.asarray(0, dtype=y.dtype)
    o_ref[...] = (y * jnp.where(keep, scale, zero)).astype(o_ref.dtype)


# --------------------------------------------------------------------------------------
# PE table (pure JAX, built once)
# --------------------------------------------------------------------------------------
def make_positional_encoding_table(d_model: int, max_len: int = 5000) -> jnp.ndarray:
    """Sinusoidal table, shape [max_len, 1, d_model] (same layout as the torch buffer)."""
    position = jnp.arange(max_len, dtype=jnp.float32)[:, None]                 # (max_len, 1)
    div_term = jnp.exp(
        jnp.arange(0, d_model, 2, dtype=jnp.float32) * (-math.log(10000.0) / d_model)
    )                                                                          # (d_model//2,)
    pe = jnp.zeros((max_len, d_model), dtype=jnp.float32)
    pe = pe.at[:, 0::2].set(jnp.sin(position * div_term))
    pe = pe.at[:, 1::2].set(jnp.cos(position * div_term))
    return pe[:, None, :]                                                      # (max_len, 1, d_model)


# --------------------------------------------------------------------------------------
# Wrapper
# --------------------------------------------------------------------------------------
def _choose_tile_seq(S: int, B: int, D: int, itemsize: int,
                     target_bytes: int = 1 << 20) -> int:
    """Pick a seq-tile so one x block is roughly `target_bytes` (keeps 2x-buffered
    x + bits + out + pe comfortably inside the scoped-VMEM default on v5e/v6e/v7x)."""
    row_bytes = max(1, B * D * itemsize)
    tile = max(1, min(S, target_bytes // row_bytes))
    if tile >= 8:
        tile = (tile // 8) * 8
    return tile


def positional_encoding_forward(x, pe_table, *, dropout_p=0.1, training=True,
                                rng_key=None, tile_seq=None):
    """x: [seq_len, batch, d_model] -> dropout(x + pe[:seq_len]), same shape/dtype."""
    S, B, D = x.shape
    assert pe_table.shape[0] >= S and pe_table.shape[-1] == D
    pe_slice = pe_table[:S]
    if pe_slice.ndim == 2:
        pe_slice = pe_slice[:, None, :]
    pe_slice = pe_slice.astype(jnp.float32)                                    # (S, 1, D)

    tile_s = tile_seq if tile_seq is not None else _choose_tile_seq(S, B, D, x.dtype.itemsize)
    tile_s = max(1, min(tile_s, S))
    grid = (pl.cdiv(S, tile_s),)

    x_spec = pl.BlockSpec((tile_s, B, D), lambda i: (i, 0, 0))
    pe_spec = pl.BlockSpec((tile_s, 1, D), lambda i: (i, 0, 0))
    out_spec = pl.BlockSpec((tile_s, B, D), lambda i: (i, 0, 0))
    compiler_params = pltpu.CompilerParams(dimension_semantics=("parallel",))
    out_shape = jax.ShapeDtypeStruct((S, B, D), x.dtype)

    apply_dropout = bool(training) and float(dropout_p) > 0.0

    if not apply_dropout:
        return pl.pallas_call(
            _pos_enc_kernel,
            out_shape=out_shape,
            grid_spec=pltpu.PrefetchScalarGridSpec(
                num_scalar_prefetch=0,
                grid=grid,
                in_specs=[x_spec, pe_spec],
                out_specs=out_spec,
            ),
            compiler_params=compiler_params,
        )(x, pe_slice)

    if rng_key is None:
        rng_key = jax.random.PRNGKey(0)
    bits = jax.random.bits(rng_key, (S, B, D), dtype=jnp.uint32)
    bits_spec = pl.BlockSpec((tile_s, B, D), lambda i: (i, 0, 0))

    keep_threshold = min(int(round(float(dropout_p) * 2.0 ** 32)), 2 ** 32 - 1)
    inv_keep = 1.0 / (1.0 - float(dropout_p))
    kernel = functools.partial(
        _pos_enc_dropout_kernel, keep_threshold=keep_threshold, inv_keep=inv_keep
    )

    return pl.pallas_call(
        kernel,
        out_shape=out_shape,
        grid_spec=pltpu.PrefetchScalarGridSpec(
            num_scalar_prefetch=0,
            grid=grid,
            in_specs=[x_spec, pe_spec, bits_spec],
            out_specs=out_spec,
        ),
        compiler_params=compiler_params,
    )(x, pe_slice, bits)


# --------------------------------------------------------------------------------------
# Self-test
# --------------------------------------------------------------------------------------
if __name__ == "__main__":
    dropout_p = 0.1

    # Small shapes consistent with the module: [seq_len, batch, d_model]
    seq_len, batch, d_model = 8, 2, 32
    key = jax.random.PRNGKey(0)
    kx, kd, kx2, kd2 = jax.random.split(key, 4)

    x = jax.random.normal(kx, (seq_len, batch, d_model), dtype=jnp.float32)
    pe_table = make_positional_encoding_table(d_model, max_len=5000)

    # Training mode (dropout active).
    out_train = positional_encoding_forward(
        x, pe_table, dropout_p=dropout_p, training=True, rng_key=kd
    )
    jax.block_until_ready(out_train)
    assert out_train.shape == (seq_len, batch, d_model)
    assert out_train.dtype == x.dtype

    # Eval mode: dropout is identity -> must match the pure-JAX reference exactly.
    out_eval = positional_encoding_forward(x, pe_table, dropout_p=dropout_p, training=False)
    ref_eval = x + pe_table[:seq_len]          # (S,1,D) broadcasts over batch
    jax.block_until_ready(out_eval)
    assert jnp.allclose(out_eval, ref_eval, atol=1e-6, rtol=1e-6)

    # Training-mode invariant: every element is either dropped (0) or scaled by 1/(1-p).
    scaled = ref_eval / (1.0 - dropout_p)
    ok = jnp.isclose(out_train, 0.0, atol=1e-6) | jnp.isclose(
        out_train, scaled, atol=1e-5, rtol=1e-5
    )
    assert bool(jnp.all(ok))

    # Exercise a multi-tile grid (seq tiled into 4 blocks) on a slightly larger shape.
    S2, B2, D2 = 64, 4, 128
    x2 = jax.random.normal(kx2, (S2, B2, D2), dtype=jnp.float32)
    pe_table2 = make_positional_encoding_table(D2, max_len=5000)

    out2_eval = positional_encoding_forward(
        x2, pe_table2, dropout_p=dropout_p, training=False, tile_seq=16
    )
    ref2_eval = x2 + pe_table2[:S2]
    jax.block_until_ready(out2_eval)
    assert jnp.allclose(out2_eval, ref2_eval, atol=1e-6, rtol=1e-6)

    out2_train = positional_encoding_forward(
        x2, pe_table2, dropout_p=dropout_p, training=True, rng_key=kd2, tile_seq=16
    )
    jax.block_until_ready(out2_train)
    scaled2 = ref2_eval / (1.0 - dropout_p)
    ok2 = jnp.isclose(out2_train, 0.0, atol=1e-6) | jnp.isclose(
        out2_train, scaled2, atol=1e-5, rtol=1e-5
    )
    assert bool(jnp.all(ok2))
    # sanity: dropout actually dropped a plausible fraction of elements
    drop_frac = float(jnp.mean(jnp.isclose(out2_train, 0.0, atol=1e-6)))
    assert 0.02 < drop_frac < 0.25

    print("KERNEL_OK")
</pallas_src>

<mosaic_0001>
module attributes {stable_mosaic.version = 11 : i64} {
  func.func @_pos_enc_dropout_kernel(%arg0: i32, %arg1: memref<8x2x32xf32, #tpu.memory_space<vmem>>, %arg2: memref<8x1x32xf32, #tpu.memory_space<vmem>>, %arg3: memref<8x2x32xi32, #tpu.memory_space<vmem>>, %arg4: memref<8x2x32xf32, #tpu.memory_space<vmem>>) attributes {dimension_semantics = [#tpu.dimension_semantics<parallel>], iteration_bounds = array<i64: 1>, scalar_prefetch = 0 : i64, scratch_operands = 0 : i64, tpu.core_type = #tpu.core_type<tc>, window_params = [{transform_indices = @transform_0, window_bounds = array<i64: 8, 2, 32>}, {transform_indices = @transform_1, window_bounds = array<i64: 8, 1, 32>}, {transform_indices = @transform_2, window_bounds = array<i64: 8, 2, 32>}, {transform_indices = @transform_3, window_bounds = array<i64: 8, 2, 32>}]} {
    %c0 = arith.constant 0 : index
    %c0_0 = arith.constant 0 : index
    %c0_1 = arith.constant 0 : index
    %0 = vector.load %arg2[%c0, %c0_0, %c0_1] : memref<8x1x32xf32, #tpu.memory_space<vmem>>, vector<8x1x32xf32>
    %c0_2 = arith.constant 0 : index
    %c0_3 = arith.constant 0 : index
    %c0_4 = arith.constant 0 : index
    %1 = vector.load %arg1[%c0_2, %c0_3, %c0_4] : memref<8x2x32xf32, #tpu.memory_space<vmem>>, vector<8x2x32xf32>
    %2 = vector.broadcast %0 : vector<8x1x32xf32> to vector<8x2x32xf32>
    %3 = arith.addf %1, %2 : vector<8x2x32xf32>
    %c0_5 = arith.constant 0 : index
    %c0_6 = arith.constant 0 : index
    %c0_7 = arith.constant 0 : index
    %4 = vector.load %arg3[%c0_5, %c0_6, %c0_7] : memref<8x2x32xi32, #tpu.memory_space<vmem>>, vector<8x2x32xi32>
    %c429496730_i32 = arith.constant 429496730 : i32
    %5 = vector.broadcast %c429496730_i32 : i32 to vector<8x2x32xi32>
    %6 = arith.cmpi uge, %4, %5 : vector<8x2x32xi32>
    %cst = arith.constant 1.11111116 : f32
    %cst_8 = arith.constant 0.000000e+00 : f32
    %7 = vector.broadcast %cst : f32 to vector<8x2x32xf32>
    %8 = vector.broadcast %cst_8 : f32 to vector<8x2x32xf32>
    %9 = arith.select %6, %7, %8 : vector<8x2x32xi1>, vector<8x2x32xf32>
    %10 = arith.mulf %3, %9 : vector<8x2x32xf32>
    %c0_9 = arith.constant 0 : index
    %c0_10 = arith.constant 0 : index
    %c0_11 = arith.constant 0 : index
    %11 = vector.load %arg4[%c0_9, %c0_10, %c0_11] : memref<8x2x32xf32, #tpu.memory_space<vmem>>, vector<8x2x32xf32>
    tpu.vector_store %arg4[%c0_9, %c0_10, %c0_11], %10 {strides = array<i32>} : memref<8x2x32xf32, #tpu.memory_space<vmem>>, vector<8x2x32xf32>,
    return
  }
  func.func @transform_0(%arg0: i32) -> (i32, i32, i32) {
    %c0_i32 = arith.constant 0 : i32
    %c0_i32_0 = arith.constant 0 : i32
    %c0_i32_1 = arith.constant 0 : i32
    return %arg0, %c0_i32, %c0_i32_0 : i32, i32, i32
  }
  func.func @transform_1(%arg0: i32) -> (i32, i32, i32) {
    %c0_i32 = arith.constant 0 : i32
    %c0_i32_0 = arith.constant 0 : i32
    %c0_i32_1 = arith.constant 0 : i32
    return %arg0, %c0_i32, %c0_i32_0 : i32, i32, i32
  }
  func.func @transform_2(%arg0: i32) -> (i32, i32, i32) {
    %c0_i32 = arith.constant 0 : i32
    %c0_i32_0 = arith.constant 0 : i32
    %c0_i32_1 = arith.constant 0 : i32
    return %arg0, %c0_i32, %c0_i32_0 : i32, i32, i32
  }
  func.func @transform_3(%arg0: i32) -> (i32, i32, i32) {
    %c0_i32 = arith.constant 0 : i32
    %c0_i32_0 = arith.constant 0 : i32
    %c0_i32_1 = arith.constant 0 : i32
    return %arg0, %c0_i32, %c0_i32_0 : i32, i32, i32
  }
}

</mosaic_0001>

<llo_original>
// kernel: tpu_custom_call.1
$region0: #{tpu_custom_call.1}
  #allocation0 [shape = 'u32[]', space=smem, size = 0x4, offset = 0x4, fixed_abs, tag = 'smem constant byte address 0x4 - core index']
  #allocation1 [shape = 'u32[144,128]{1,0:T(1,128)}', space=vmem, size = 0x12000, scoped, tag = 'internal scratch']
  %s0 = inlined_call_operand.hbm [shape: f32[8,2,32], index: 0, kind: input, shape index: {}]
  %s1 = inlined_call_operand.hbm [shape: f32[8,1,32], index: 1, kind: input, shape index: {}]
  %s2 = inlined_call_operand.hbm [shape: u32[8,2,32], index: 2, kind: input, shape index: {}]
  %s3 = inlined_call_operand.hbm [shape: f32[8,2,32], index: 3, kind: output, shape index: {}]
  %s4 = sld [smem:[#allocation0]]
  $region34: #{tpu_custom_call.1} parent=0
    _
  %s6 = ssub.s32 1, %s4
  %s7 = scalar_select 0, %s6, %s4
  $region1: #{tpu_custom_call.1} parent=0
    #allocation2 [shape = 'u8[8192]{0}', space=vmem, size = 0x2000, scoped, tag = 'input window, operand 0, single buffered']
    #allocation3 [shape = 's32[1]{0}', space=sflag, size = 0x4, scoped, tag = 'scoped memory for tpu_custom_call.1']
    #allocation4 [shape = 's32[1]{0}', space=sflag, size = 0x4, scoped, tag = 'scoped memory for tpu_custom_call.1']
    #allocation5 [shape = 'u8[4096]{0}', space=vmem, size = 0x1000, scoped, tag = 'input window, operand 1, single buffered']
    #allocation6 [shape = 's32[1]{0}', space=sflag, size = 0x4, scoped, tag = 'scoped memory for tpu_custom_call.1']
    #allocation7 [shape = 'u8[8192]{0}', space=vmem, size = 0x2000, scoped, tag = 'input window, operand 2, single buffered']
    #allocation8 [shape = 'u8[8192]{0}', space=vmem, size = 0x2000, scoped, tag = 'output window, operand 0, single buffered']
    %8 = vsyncpa [#allocation3], 0
    %9 = vsyncpa [#allocation6], 0
    %10 = vsyncpa [#allocation4], 0
    // Predicated region
    $region2: #{tpu_custom_call.1} parent=1 // pred_check
      _
    $region3: #{tpu_custom_call.1} parent=1 // pred_check_branch
      %12 = sbr.rel (0) target = $region5
    $region4: #{tpu_custom_call.1} parent=1 // pred_region
      %s14 = ssub.s32 256, 256
      %15 = vsyncadd [#allocation3], %s14
      %s16 = sshll.u32 [#allocation2], 4
      %s17 = int_to_ptr.vmem [resolvable:$true] %s16
      %22 = dma.hbm_to_vmem [thread:$0]  %s0, 256, %s17, [#allocation3], 32, 32, 2
    $region5: #{tpu_custom_call.1} parent=1 // pred_fallthru
      _
    // Predicated region
    $region6: #{tpu_custom_call.1} parent=1 // pred_check
      _
    $region7: #{tpu_custom_call.1} parent=1 // pred_check_branch
      %24 = sbr.rel (0) target = $region9
    $region8: #{tpu_custom_call.1} parent=1 // pred_region
      %s26 = ssub.s32 128, 128
      %27 = vsyncadd [#allocation6], %s26
      %s28 = sshll.u32 [#allocation5], 4
      %s29 = int_to_ptr.vmem [resolvable:$true] %s28
      %34 = dma.hbm_to_vmem [thread:$0]  %s1, 128, %s29, [#allocation6], 16, 16, 1
    $region9: #{tpu_custom_call.1} parent=1 // pred_fallthru
      _
    // Predicated region
    $region10: #{tpu_custom_call.1} parent=1 // pred_check
      _
    $region11: #{tpu_custom_call.1} parent=1 // pred_check_branch
      %36 = sbr.rel (0) target = $region13
    $region12: #{tpu_custom_call.1} parent=1 // pred_region
      %s38 = ssub.s32 256, 256
      %39 = vsyncadd [#allocation6], %s38
      %s40 = sshll.u32 [#allocation7], 4
      %s41 = int_to_ptr.vmem [resolvable:$true] %s40
      %46 = dma.hbm_to_vmem [thread:$0]  %s2, 256, %s41, [#allocation6], 32, 32, 2
    $region13: #{tpu_custom_call.1} parent=1 // pred_fallthru
      _
    // Predicated region
    $region14: #{tpu_custom_call.1} parent=1 // pred_check
      _
    $region15: #{tpu_custom_call.1} parent=1 // pred_check_branch
      %48 = sbr.rel (0) target = $region17
    $region16: #{tpu_custom_call.1} parent=1 // pred_region
      %49 = dma.done [#allocation3], 256
    $region17: #{tpu_custom_call.1} parent=1 // pred_fallthru
      _
    // Predicated region
    $region18: #{tpu_custom_call.1} parent=1 // pred_check
      _
    $region19: #{tpu_custom_call.1} parent=1 // pred_check_branch
      %51 = sbr.rel (0) target = $region21
    $region20: #{tpu_custom_call.1} parent=1 // pred_region
      %52 = dma.done [#allocation6], 128
    $region21: #{tpu_custom_call.1} parent=1 // pred_fallthru
      _
    // Predicated region
    $region22: #{tpu_custom_call.1} parent=1 // pred_check
      _
    $region23: #{tpu_custom_call.1} parent=1 // pred_check_branch
      %54 = sbr.rel (0) target = $region25
    $region24: #{tpu_custom_call.1} parent=1 // pred_region
      %55 = dma.done [#allocation6], 256
    $region25: #{tpu_custom_call.1} parent=1 // pred_fallthru
      _
    %v56 = vld [vmem:[#allocation5] sm:$0x1]
    %v57 = vld [vmem:[#allocation5 + $0x1] sm:$0x1]
    %v58 = vld [vmem:[#allocation5 + $0x2] sm:$0x1]
    %v59 = vld [vmem:[#allocation5 + $0x3] sm:$0x1]
    %v60 = vld [vmem:[#allocation5 + $0x4] sm:$0x1]
    %v61 = vld [vmem:[#allocation5 + $0x5] sm:$0x1]
    %v62 = vld [vmem:[#allocation5 + $0x6] sm:$0x1]
    %v63 = vld [vmem:[#allocation5 + $0x7] sm:$0x1]
    %v64 = vld [vmem:[#allocation2] sm:$0x3]
    %v65 = vld [vmem:[#allocation2 + $0x2] sm:$0x3]
    %v66 = vld [vmem:[#allocation2 + $0x4] sm:$0x3]
    %v67 = vld [vmem:[#allocation2 + $0x6] sm:$0x3]
    %v68 = vld [vmem:[#allocation2 + $0x8] sm:$0x3]
    %v69 = vld [vmem:[#allocation2 + $0xa] sm:$0x3]
    %v70 = vld [vmem:[#allocation2 + $0xc] sm:$0x3]
    %v71 = vld [vmem:[#allocation2 + $0xe] sm:$0x3]
    %v80 = vlaneseq
    %v81 = vshrl.u32 %v80, 7
    %v82 = vsub.s32 0, %v81
    %v83 = vrot.slane %v56, %v82
    %v84 = vlaneseq
    %v85 = vshrl.u32 %v84, 7
    %v86 = vsub.s32 0, %v85
    %v87 = vrot.slane %v57, %v86
    %v88 = vlaneseq
    %v89 = vshrl.u32 %v88, 7
    %v90 = vsub.s32 0, %v89
    %v91 = vrot.slane %v58, %v90
    %v92 = vlaneseq
    %v93 = vshrl.u32 %v92, 7
    %v94 = vsub.s32 0, %v93
    %v95 = vrot.slane %v59, %v94
    %v96 = vlaneseq
    %v97 = vshrl.u32 %v96, 7
    %v98 = vsub.s32 0, %v97
    %v99 = vrot.slane %v60, %v98
    %v100 = vlaneseq
    %v101 = vshrl.u32 %v100, 7
    %v102 = vsub.s32 0, %v101
    %v103 = vrot.slane %v61, %v102
    %v104 = vlaneseq
    %v105 = vshrl.u32 %v104, 7
    %v106 = vsub.s32 0, %v105
    %v107 = vrot.slane %v62, %v106
    %v108 = vlaneseq
    %v109 = vshrl.u32 %v108, 7
    %v110 = vsub.s32 0, %v109
    %v111 = vrot.slane %v63, %v110
    %v120 = vadd.f32 %v64, %v83
    %v121 = vadd.f32 %v65, %v87
    %v122 = vadd.f32 %v66, %v91
    %v123 = vadd.f32 %v67, %v95
    %v124 = vadd.f32 %v68, %v99
    %v125 = vadd.f32 %v69, %v103
    %v126 = vadd.f32 %v70, %v107
    %v127 = vadd.f32 %v71, %v111
    %v128 = vld [vmem:[#allocation7] sm:$0x3]
    %v129 = vld [vmem:[#allocation7 + $0x2] sm:$0x3]
    %v130 = vld [vmem:[#allocation7 + $0x4] sm:$0x3]
    %v131 = vld [vmem:[#allocation7 + $0x6] sm:$0x3]
    %v132 = vld [vmem:[#allocation7 + $0x8] sm:$0x3]
    %v133 = vld [vmem:[#allocation7 + $0xa] sm:$0x3]
    %v134 = vld [vmem:[#allocation7 + $0xc] sm:$0x3]
    %v135 = vld [vmem:[#allocation7 + $0xe] sm:$0x3]
    %vm136 = vcmp.ge.u32.totalorder %v128, 429496730
    %vm137 = vcmp.ge.u32.totalorder %v129, 429496730
    %vm138 = vcmp.ge.u32.totalorder %v130, 429496730
    %vm139 = vcmp.ge.u32.totalorder %v131, 429496730
    %vm140 = vcmp.ge.u32.totalorder %v132, 429496730
    %vm141 = vcmp.ge.u32.totalorder %v133, 429496730
    %vm142 = vcmp.ge.u32.totalorder %v134, 429496730
    %vm143 = vcmp.ge.u32.totalorder %v135, 429496730
    %v144 = vsel %vm136, 1.1111112, 0.0
    %v145 = vsel %vm137, 1.1111112, 0.0
    %v146 = vsel %vm138, 1.1111112, 0.0
    %v147 = vsel %vm139, 1.1111112, 0.0
    %v148 = vsel %vm140, 1.1111112, 0.0
    %v149 = vsel %vm141, 1.1111112, 0.0
    %v150 = vsel %vm142, 1.1111112, 0.0
    %v151 = vsel %vm143, 1.1111112, 0.0
    %v152 = vmul.f32 %v120, %v144
    %v153 = vmul.f32 %v121, %v145
    %v154 = vmul.f32 %v122, %v146
    %v155 = vmul.f32 %v123, %v147
    %v156 = vmul.f32 %v124, %v148
    %v157 = vmul.f32 %v125, %v149
    %v158 = vmul.f32 %v126, %v150
    %v159 = vmul.f32 %v127, %v151
    %vm160 = vcmask 254976
    %161 = vst.msk [vmem:[#allocation8] sm:$0x3] %vm160, %v152
    %162 = vst.msk [vmem:[#allocation8 + $0x2] sm:$0x3] %vm160, %v153
    %163 = vst.msk [vmem:[#allocation8 + $0x4] sm:$0x3] %vm160, %v154
    %164 = vst.msk [vmem:[#allocation8 + $0x6] sm:$0x3] %vm160, %v155
    %165 = vst.msk [vmem:[#allocation8 + $0x8] sm:$0x3] %vm160, %v156
    %166 = vst.msk [vmem:[#allocation8 + $0xa] sm:$0x3] %vm160, %v157
    %167 = vst.msk [vmem:[#allocation8 + $0xc] sm:$0x3] %vm160, %v158
    %168 = vst.msk [vmem:[#allocation8 + $0xe] sm:$0x3] %vm160, %v159
    // Predicated region
    $region26: #{tpu_custom_call.1} parent=1 // pred_check
      _
    $region27: #{tpu_custom_call.1} parent=1 // pred_check_branch
      %170 = sbr.rel (0) target = $region29
    $region28: #{tpu_custom_call.1} parent=1 // pred_region
      %s172 = ssub.s32 256, 256
      %173 = vsyncadd [#allocation4], %s172
      %s174 = sshll.u32 [#allocation8], 4
      %s175 = int_to_ptr.vmem [resolvable:$true] %s174
      %180 = dma.vmem_to_hbm [thread:$0]  %s175, 256, %s3, [#allocation4], 32, 32, 2
    $region29: #{tpu_custom_call.1} parent=1 // pred_fallthru
      _
    // Predicated region
    $region30: #{tpu_custom_call.1} parent=1 // pred_check
      _
    $region31: #{tpu_custom_call.1} parent=1 // pred_check_branch
      %182 = sbr.rel (0) target = $region33
    $region32: #{tpu_custom_call.1} parent=1 // pred_region
      %183 = dma.done [#allocation4], 256
    $region33: #{tpu_custom_call.1} parent=1 // pred_fallthru
      _
    %184 = vsyncpa [#allocation3], 1
    %185 = vsyncpa [#allocation6], 1
    %186 = vsyncpa [#allocation4], 1

</llo_original>
